<compile_context>
chip_gen: v6e
topology: v6e:2x2x1
jax: 0.10.0
libtpu: 0.0.40
codegen_flags: <defaults>
</compile_context>

<pallas_src>
import functools

import jax
import jax.numpy as jnp
import numpy as np
from jax.experimental import pallas as pl
from jax.experimental.pallas import tpu as pltpu


def lstm_fc_kernel(xp_ref, w_hh_ref, w_fc_ref, b_fc_ref, out_ref,
                   h_scr, c_scr, *, hidden, t_total, t_chunk):
    """One (batch-tile, time-chunk) grid step of the LSTM recurrence (+ final FC).

    xp_ref  : (Tt, Bt, G4p)  streamed input projection for this chunk (f32 or bf16)
    w_hh_ref: (H, G4p)       recurrent weights, packed gate order (i,f,o,g), f32
    w_fc_ref: (H, Cp)        final linear weights, f32
    b_fc_ref: (1, Cp)        final linear bias, f32
    out_ref : (Bt, Cp)       logits tile (written only on the last time chunk)
    h_scr/c_scr: (Bt, H)     recurrent state carried across time chunks (f32)
    """
    H = hidden
    tc = pl.program_id(1)
    n_tc = pl.num_programs(1)

    @pl.when(tc == 0)
    def _():
        h_scr[...] = jnp.zeros_like(h_scr)
        c_scr[...] = jnp.zeros_like(c_scr)

    # Recurrent weights loaded once per chunk; state lives in vregs inside the loop.
    w_hh = w_hh_ref[...]
    h = h_scr[...]
    c = c_scr[...]

    needs_mask = (t_total % t_chunk) != 0  # static: only if T was padded up to Tp

    for ti in range(t_chunk):  # small static chunk -> unrolled, LLO-visible
        xp = xp_ref[ti].astype(jnp.float32)                    # (Bt, G4p)
        gates = xp + jnp.dot(h, w_hh, preferred_element_type=jnp.float32)
        # packed gate layout: [ i | f | o | g ], each H lanes wide
        sig = jax.nn.sigmoid(gates[:, 0:3 * H])                # one EUP pass, 3 gates
        i_g = sig[:, 0 * H:1 * H]
        f_g = sig[:, 1 * H:2 * H]
        o_g = sig[:, 2 * H:3 * H]
        g_g = jnp.tanh(gates[:, 3 * H:4 * H])
        c_new = f_g * c + i_g * g_g
        h_new = o_g * jnp.tanh(c_new)
        if needs_mask:
            valid = (tc * t_chunk + ti) < t_total
            c = jnp.where(valid, c_new, c)
            h = jnp.where(valid, h_new, h)
        else:
            c, h = c_new, h_new

    h_scr[...] = h
    c_scr[...] = c

    @pl.when(tc == n_tc - 1)
    def _():
        out_ref[...] = (
            jnp.dot(h, w_fc_ref[...], preferred_element_type=jnp.float32)
            + b_fc_ref[...]
        ).astype(out_ref.dtype)


def _round_up(x, m):
    return ((x + m - 1) // m) * m


def init_params(key, vocab_size, embed_dim, hidden_dim, num_class):
    """Deterministic synthetic parameters mirroring the PyTorch module shapes."""
    ks = jax.random.split(key, 7)
    k_lstm = 1.0 / np.sqrt(hidden_dim)
    k_fc = 1.0 / np.sqrt(hidden_dim)
    params = {
        # nn.Embedding(vocab_size, embed_dim): weight ~ N(0, 1)
        "emb": jax.random.normal(ks[0], (vocab_size, embed_dim), jnp.float32),
        # nn.LSTM(embed_dim, hidden_dim): weight_ih (4H, E) stored transposed (E, 4H)
        "w_ih": jax.random.uniform(ks[1], (embed_dim, 4 * hidden_dim),
                                   jnp.float32, -k_lstm, k_lstm),
        "w_hh": jax.random.uniform(ks[2], (hidden_dim, 4 * hidden_dim),
                                   jnp.float32, -k_lstm, k_lstm),
        "b_ih": jax.random.uniform(ks[3], (4 * hidden_dim,), jnp.float32,
                                   -k_lstm, k_lstm),
        "b_hh": jax.random.uniform(ks[4], (4 * hidden_dim,), jnp.float32,
                                   -k_lstm, k_lstm),
        # nn.Linear(hidden_dim, num_class): weight (C, H) stored transposed (H, C)
        "w_fc": jax.random.uniform(ks[5], (hidden_dim, num_class), jnp.float32,
                                   -k_fc, k_fc),
        "b_fc": jax.random.uniform(ks[6], (num_class,), jnp.float32,
                                   -k_fc, k_fc),
    }
    return params


def text_classifier_forward(text, params, *, use_bf16=False,
                            max_batch_tile=128, max_time_chunk=16):
    """Forward pass equivalent to the PyTorch TextClassifier.forward."""
    emb_table = params["emb"]
    w_ih, w_hh = params["w_ih"], params["w_hh"]          # (E, 4H), (H, 4H)
    b = params["b_ih"] + params["b_hh"]                  # (4H,)
    w_fc, b_fc = params["w_fc"], params["b_fc"]          # (H, C), (C,)

    B, T = text.shape
    E = emb_table.shape[1]
    H = w_hh.shape[0]
    C = w_fc.shape[1]

    # Packed-gate width: only 4H padded up to a lane multiple (no per-gate padding).
    G4 = 4 * H
    G4p = _round_up(G4, 128)
    Cp = _round_up(C, 128)

    # Batch tiles: sublane-aligned, "parallel" grid axis (v7x: 2 TensorCores).
    Bt = min(_round_up(B, 8), max_batch_tile)
    n_b = pl.cdiv(_round_up(B, 8), Bt)
    Bp = n_b * Bt
    # Time chunks: streamed "arbitrary" axis; bounds VMEM and overlaps DMA with compute.
    Tt = min(T, max_time_chunk)
    n_t = pl.cdiv(T, Tt)
    Tp = n_t * Tt

    def pack_gates(w):
        # PyTorch gate order (i, f, g, o) -> packed (i, f, o, g) + pad 4H -> G4p lanes.
        i = w[..., 0 * H:1 * H]
        f = w[..., 1 * H:2 * H]
        g = w[..., 2 * H:3 * H]
        o = w[..., 3 * H:4 * H]
        packed = jnp.concatenate([i, f, o, g], axis=-1)
        pad = [(0, 0)] * (w.ndim - 1) + [(0, G4p - G4)]
        return jnp.pad(packed, pad)

    w_ih_p = pack_gates(w_ih)                                # (E, G4p)
    w_hh_p = pack_gates(w_hh)                                # (H, G4p) stays f32
    b_p = pack_gates(b[None, :])                             # (1, G4p)
    w_fc_p = jnp.pad(w_fc, ((0, 0), (0, Cp - C)))            # (H, Cp)
    b_fc_p = jnp.pad(b_fc, (0, Cp - C))[None, :]             # (1, Cp)

    # Embedding gather + the big input-projection GEMM stay in XLA (time-major gather
    # avoids an extra transpose pass). bf16 matmul inputs are fine on v5e/v6e/v7x;
    # the accumulation and the recurrence stay f32.
    mm_dtype = jnp.bfloat16 if use_bf16 else jnp.float32
    x_dtype = jnp.bfloat16 if use_bf16 else jnp.float32

    emb_tm = jnp.take(emb_table, text.T, axis=0)             # (T, B, E)
    xproj = jnp.einsum("tbe,eg->tbg",
                       emb_tm.astype(mm_dtype), w_ih_p.astype(mm_dtype),
                       preferred_element_type=jnp.float32) + b_p
    xproj = xproj.astype(x_dtype)                            # (T, B, G4p)
    xproj = jnp.pad(xproj, ((0, Tp - T), (0, Bp - B), (0, 0)))  # (Tp, Bp, G4p)

    # Advisory cost + VMEM limit sized from the actual buffers (with headroom).
    x_elem = 2 if use_bf16 else 4
    flops = 2 * Tp * Bp * H * G4p + 2 * Bp * H * Cp
    transcendentals = Tp * Bp * (G4p + H)
    bytes_accessed = (Tp * Bp * G4p * x_elem
                      + (H * G4p + H * Cp + Cp) * 4
                      + Bp * Cp * 4)
    cost = pl.CostEstimate(flops=flops, transcendentals=transcendentals,
                           bytes_accessed=bytes_accessed)

    tile_bytes = (2 * Tt * Bt * G4p * x_elem                 # double-buffered xproj tile
                  + 2 * Bt * Cp * 4                          # output tile
                  + (H * G4p + H * Cp + Cp) * 4              # resident weights
                  + 2 * Bt * max(H, 128) * 4)                # h/c scratch (lane-padded)
    vmem_limit = int(min(max(4 * tile_bytes, 16 * 1024 * 1024), 64 * 1024 * 1024))

    kernel = functools.partial(lstm_fc_kernel, hidden=H, t_total=T, t_chunk=Tt)

    out_padded = pl.pallas_call(
        kernel,
        out_shape=jax.ShapeDtypeStruct((Bp, Cp), jnp.float32),
        grid_spec=pltpu.PrefetchScalarGridSpec(
            num_scalar_prefetch=0,
            grid=(n_b, n_t),
            in_specs=[
                # streamed per (batch-tile, time-chunk)
                pl.BlockSpec((Tt, Bt, G4p), lambda bi, ti: (ti, bi, 0)),
                # small constant weights, resident
                pl.BlockSpec((H, G4p), lambda bi, ti: (0, 0)),
                pl.BlockSpec((H, Cp), lambda bi, ti: (0, 0)),
                pl.BlockSpec((1, Cp), lambda bi, ti: (0, 0)),
            ],
            out_specs=pl.BlockSpec((Bt, Cp), lambda bi, ti: (bi, 0)),
            scratch_shapes=[
                pltpu.VMEM((Bt, H), jnp.float32),            # h carry
                pltpu.VMEM((Bt, H), jnp.float32),            # c carry
            ],
        ),
        compiler_params=pltpu.CompilerParams(
            dimension_semantics=("parallel", "arbitrary"),
            vmem_limit_bytes=vmem_limit,
        ),
        cost_estimate=cost,
    )(xproj, w_hh_p, w_fc_p, b_fc_p)

    return out_padded[:B, :C]


def reference_forward(text, params):
    """Pure-JAX f32 reference (PyTorch gate order i,f,g,o) for a correctness check."""
    embedded = jnp.take(params["emb"], text, axis=0)
    B, T, E = embedded.shape
    H = params["w_hh"].shape[0]
    b = (params["b_ih"] + params["b_hh"])[None, :]

    h = jnp.zeros((B, H), jnp.float32)
    c = jnp.zeros((B, H), jnp.float32)
    for t in range(T):
        g = embedded[:, t, :] @ params["w_ih"] + h @ params["w_hh"] + b
        i_g = jax.nn.sigmoid(g[:, 0 * H:1 * H])
        f_g = jax.nn.sigmoid(g[:, 1 * H:2 * H])
        g_g = jnp.tanh(g[:, 2 * H:3 * H])
        o_g = jax.nn.sigmoid(g[:, 3 * H:4 * H])
        c = f_g * c + i_g * g_g
        h = o_g * jnp.tanh(c)
    return h @ params["w_fc"] + params["b_fc"][None, :]


if __name__ == "__main__":
    vocab_size, embed_dim, hidden_dim, num_class = 50, 32, 32, 4
    batch, seq_len = 2, 8

    key = jax.random.PRNGKey(0)
    k_text, k_params = jax.random.split(key)

    params = init_params(k_params, vocab_size, embed_dim, hidden_dim, num_class)
    text = jax.random.randint(k_text, (batch, seq_len), 0, vocab_size,
                              dtype=jnp.int32)

    ref = jax.block_until_ready(reference_forward(text, params))

    # f32 path, single time chunk.
    logits = jax.block_until_ready(
        text_classifier_forward(text, params, use_bf16=False))
    assert logits.shape == (batch, num_class)
    assert np.allclose(np.asarray(logits), np.asarray(ref), atol=1e-4, rtol=1e-4)

    # f32 path, multiple streamed time chunks with a ragged tail (exercises the
    # time-chunk grid + padded-step masking).
    logits_chunked = jax.block_until_ready(
        text_classifier_forward(text, params, use_bf16=False, max_time_chunk=3))
    assert np.allclose(np.asarray(logits_chunked), np.asarray(ref),
                       atol=1e-4, rtol=1e-4)

    # bf16 matmul-input / bf16-streamed-xproj path (applies to v5e/v6e/v7x);
    # recurrence and state stay f32, so only the input projection is rounded.
    logits_bf16 = jax.block_until_ready(
        text_classifier_forward(text, params, use_bf16=True))
    assert logits_bf16.shape == (batch, num_class)
    assert np.allclose(np.asarray(logits_bf16), np.asarray(ref),
                       atol=5e-2, rtol=5e-2)

    print("KERNEL_OK")
</pallas_src>

<mosaic_0001>
module attributes {stable_mosaic.version = 11 : i64} {
  func.func @lstm_fc_kernel(%arg0: i32, %arg1: i32, %arg2: memref<8x8x128xf32, #tpu.memory_space<vmem>>, %arg3: memref<32x128xf32, #tpu.memory_space<vmem>>, %arg4: memref<32x128xf32, #tpu.memory_space<vmem>>, %arg5: memref<1x128xf32, #tpu.memory_space<vmem>>, %arg6: memref<8x128xf32, #tpu.memory_space<vmem>>, %arg7: memref<8x32xf32, #tpu.memory_space<vmem>>, %arg8: memref<8x32xf32, #tpu.memory_space<vmem>>) attributes {dimension_semantics = [#tpu.dimension_semantics<parallel>, #tpu.dimension_semantics<arbitrary>], iteration_bounds = array<i64: 1, 1>, scalar_prefetch = 0 : i64, scratch_operands = 2 : i64, tpu.core_type = #tpu.core_type<tc>, window_params = [{transform_indices = @transform_0, window_bounds = array<i64: 8, 8, 128>}, {pipeline_mode = #tpu.pipeline_mode<synchronous>, transform_indices = @transform_1, window_bounds = array<i64: 32, 128>}, {pipeline_mode = #tpu.pipeline_mode<synchronous>, transform_indices = @transform_2, window_bounds = array<i64: 32, 128>}, {pipeline_mode = #tpu.pipeline_mode<synchronous>, transform_indices = @transform_3, window_bounds = array<i64: 1, 128>}, {transform_indices = @transform_4, window_bounds = array<i64: 8, 128>}]} {
    %c0_i32 = arith.constant 0 : i32
    %0 = arith.cmpi eq, %arg1, %c0_i32 : i32
    %1 = arith.extui %0 : i1 to i32
    %c0_i32_0 = arith.constant 0 : i32
    %2 = arith.cmpi ne, %1, %c0_i32_0 : i32
    scf.if %2 {
      %cst_44 = arith.constant 0.000000e+00 : f32
      %171 = vector.broadcast %cst_44 : f32 to vector<8x32xf32>
      %c0_45 = arith.constant 0 : index
      %c0_46 = arith.constant 0 : index
      %172 = vector.load %arg7[%c0_45, %c0_46] : memref<8x32xf32, #tpu.memory_space<vmem>>, vector<8x32xf32>
      tpu.vector_store %arg7[%c0_45, %c0_46], %171 {strides = array<i32>} : memref<8x32xf32, #tpu.memory_space<vmem>>, vector<8x32xf32>,
      %cst_47 = arith.constant 0.000000e+00 : f32
      %173 = vector.broadcast %cst_47 : f32 to vector<8x32xf32>
      %c0_48 = arith.constant 0 : index
      %c0_49 = arith.constant 0 : index
      %174 = vector.load %arg8[%c0_48, %c0_49] : memref<8x32xf32, #tpu.memory_space<vmem>>, vector<8x32xf32>
      tpu.vector_store %arg8[%c0_48, %c0_49], %173 {strides = array<i32>} : memref<8x32xf32, #tpu.memory_space<vmem>>, vector<8x32xf32>,
    } else {
    }
    %c0 = arith.constant 0 : index
    %c0_1 = arith.constant 0 : index
    %3 = vector.load %arg3[%c0, %c0_1] : memref<32x128xf32, #tpu.memory_space<vmem>>, vector<32x128xf32>
    %c0_2 = arith.constant 0 : index
    %c0_3 = arith.constant 0 : index
    %4 = vector.load %arg7[%c0_2, %c0_3] : memref<8x32xf32, #tpu.memory_space<vmem>>, vector<8x32xf32>
    %c0_4 = arith.constant 0 : index
    %c0_5 = arith.constant 0 : index
    %5 = vector.load %arg8[%c0_4, %c0_5] : memref<8x32xf32, #tpu.memory_space<vmem>>, vector<8x32xf32>
    %c0_6 = arith.constant 0 : index
    %c0_7 = arith.constant 0 : index
    %c0_8 = arith.constant 0 : index
    %6 = vector.load %arg2[%c0_6, %c0_7, %c0_8] : memref<8x8x128xf32, #tpu.memory_space<vmem>>, vector<1x8x128xf32>
    %7 = vector.shape_cast %6 : vector<1x8x128xf32> to vector<8x128xf32>
    %cst = arith.constant dense<0.000000e+00> : vector<8x128xf32>
    %8 = tpu.matmul %4, %3, %cst {dimension_numbers = #tpu.dot_dimension_numbers<[1], [0], [0], [1], [0, 0, 1, 1], [], []>} : vector<8x32xf32>, vector<32x128xf32>, vector<8x128xf32> -> vector<8x128xf32>
    %9 = arith.addf %7, %8 : vector<8x128xf32>
    %10 = vector.extract_strided_slice %9 {offsets = [0, 0], sizes = [8, 96], strides = [1, 1]} : vector<8x128xf32> to vector<8x96xf32>
    %11 = arith.negf %10 : vector<8x96xf32>
    %12 = math.exp %11 : vector<8x96xf32>
    %cst_9 = arith.constant 1.000000e+00 : f32
    %13 = vector.broadcast %cst_9 : f32 to vector<8x96xf32>
    %14 = arith.addf %13, %12 : vector<8x96xf32>
    %15 = arith.divf %13, %14 : vector<8x96xf32>
    %16 = vector.extract_strided_slice %15 {offsets = [0, 0], sizes = [8, 32], strides = [1, 1]} : vector<8x96xf32> to vector<8x32xf32>
    %17 = vector.extract_strided_slice %15 {offsets = [0, 32], sizes = [8, 32], strides = [1, 1]} : vector<8x96xf32> to vector<8x32xf32>
    %18 = vector.extract_strided_slice %15 {offsets = [0, 64], sizes = [8, 32], strides = [1, 1]} : vector<8x96xf32> to vector<8x32xf32>
    %19 = vector.extract_strided_slice %9 {offsets = [0, 96], sizes = [8, 32], strides = [1, 1]} : vector<8x128xf32> to vector<8x32xf32>
    %20 = math.tanh %19 : vector<8x32xf32>
    %21 = arith.mulf %17, %5 : vector<8x32xf32>
    %22 = arith.mulf %16, %20 : vector<8x32xf32>
    %23 = arith.addf %21, %22 : vector<8x32xf32>
    %24 = math.tanh %23 : vector<8x32xf32>
    %25 = arith.mulf %18, %24 : vector<8x32xf32>
    %c1 = arith.constant 1 : index
    %c0_10 = arith.constant 0 : index
    %c0_11 = arith.constant 0 : index
    %26 = vector.load %arg2[%c1, %c0_10, %c0_11] : memref<8x8x128xf32, #tpu.memory_space<vmem>>, vector<1x8x128xf32>
    %27 = vector.shape_cast %26 : vector<1x8x128xf32> to vector<8x128xf32>
    %cst_12 = arith.constant dense<0.000000e+00> : vector<8x128xf32>
    %28 = tpu.matmul %25, %3, %cst_12 {dimension_numbers = #tpu.dot_dimension_numbers<[1], [0], [0], [1], [0, 0, 1, 1], [], []>} : vector<8x32xf32>, vector<32x128xf32>, vector<8x128xf32> -> vector<8x128xf32>
    %29 = arith.addf %27, %28 : vector<8x128xf32>
    %30 = vector.extract_strided_slice %29 {offsets = [0, 0], sizes = [8, 96], strides = [1, 1]} : vector<8x128xf32> to vector<8x96xf32>
    %31 = arith.negf %30 : vector<8x96xf32>
    %32 = math.exp %31 : vector<8x96xf32>
    %cst_13 = arith.constant 1.000000e+00 : f32
    %33 = vector.broadcast %cst_13 : f32 to vector<8x96xf32>
    %34 = arith.addf %33, %32 : vector<8x96xf32>
    %35 = arith.divf %33, %34 : vector<8x96xf32>
    %36 = vector.extract_strided_slice %35 {offsets = [0, 0], sizes = [8, 32], strides = [1, 1]} : vector<8x96xf32> to vector<8x32xf32>
    %37 = vector.extract_strided_slice %35 {offsets = [0, 32], sizes = [8, 32], strides = [1, 1]} : vector<8x96xf32> to vector<8x32xf32>
    %38 = vector.extract_strided_slice %35 {offsets = [0, 64], sizes = [8, 32], strides = [1, 1]} : vector<8x96xf32> to vector<8x32xf32>
    %39 = vector.extract_strided_slice %29 {offsets = [0, 96], sizes = [8, 32], strides = [1, 1]} : vector<8x128xf32> to vector<8x32xf32>
    %40 = math.tanh %39 : vector<8x32xf32>
    %41 = arith.mulf %37, %23 : vector<8x32xf32>
    %42 = arith.mulf %36, %40 : vector<8x32xf32>
    %43 = arith.addf %41, %42 : vector<8x32xf32>
    %44 = math.tanh %43 : vector<8x32xf32>
    %45 = arith.mulf %38, %44 : vector<8x32xf32>
    %c2 = arith.constant 2 : index
    %c0_14 = arith.constant 0 : index
    %c0_15 = arith.constant 0 : index
    %46 = vector.load %arg2[%c2, %c0_14, %c0_15] : memref<8x8x128xf32, #tpu.memory_space<vmem>>, vector<1x8x128xf32>
    %47 = vector.shape_cast %46 : vector<1x8x128xf32> to vector<8x128xf32>
    %cst_16 = arith.constant dense<0.000000e+00> : vector<8x128xf32>
    %48 = tpu.matmul %45, %3, %cst_16 {dimension_numbers = #tpu.dot_dimension_numbers<[1], [0], [0], [1], [0, 0, 1, 1], [], []>} : vector<8x32xf32>, vector<32x128xf32>, vector<8x128xf32> -> vector<8x128xf32>
    %49 = arith.addf %47, %48 : vector<8x128xf32>
    %50 = vector.extract_strided_slice %49 {offsets = [0, 0], sizes = [8, 96], strides = [1, 1]} : vector<8x128xf32> to vector<8x96xf32>
    %51 = arith.negf %50 : vector<8x96xf32>
    %52 = math.exp %51 : vector<8x96xf32>
    %cst_17 = arith.constant 1.000000e+00 : f32
    %53 = vector.broadcast %cst_17 : f32 to vector<8x96xf32>
    %54 = arith.addf %53, %52 : vector<8x96xf32>
    %55 = arith.divf %53, %54 : vector<8x96xf32>
    %56 = vector.extract_strided_slice %55 {offsets = [0, 0], sizes = [8, 32], strides = [1, 1]} : vector<8x96xf32> to vector<8x32xf32>
    %57 = vector.extract_strided_slice %55 {offsets = [0, 32], sizes = [8, 32], strides = [1, 1]} : vector<8x96xf32> to vector<8x32xf32>
    %58 = vector.extract_strided_slice %55 {offsets = [0, 64], sizes = [8, 32], strides = [1, 1]} : vector<8x96xf32> to vector<8x32xf32>
    %59 = vector.extract_strided_slice %49 {offsets = [0, 96], sizes = [8, 32], strides = [1, 1]} : vector<8x128xf32> to vector<8x32xf32>
    %60 = math.tanh %59 : vector<8x32xf32>
    %61 = arith.mulf %57, %43 : vector<8x32xf32>
    %62 = arith.mulf %56, %60 : vector<8x32xf32>
    %63 = arith.addf %61, %62 : vector<8x32xf32>
    %64 = math.tanh %63 : vector<8x32xf32>
    %65 = arith.mulf %58, %64 : vector<8x32xf32>
    %c3 = arith.constant 3 : index
    %c0_18 = arith.constant 0 : index
    %c0_19 = arith.constant 0 : index
    %66 = vector.load %arg2[%c3, %c0_18, %c0_19] : memref<8x8x128xf32, #tpu.memory_space<vmem>>, vector<1x8x128xf32>
    %67 = vector.shape_cast %66 : vector<1x8x128xf32> to vector<8x128xf32>
    %cst_20 = arith.constant dense<0.000000e+00> : vector<8x128xf32>
    %68 = tpu.matmul %65, %3, %cst_20 {dimension_numbers = #tpu.dot_dimension_numbers<[1], [0], [0], [1], [0, 0, 1, 1], [], []>} : vector<8x32xf32>, vector<32x128xf32>, vector<8x128xf32> -> vector<8x128xf32>
    %69 = arith.addf %67, %68 : vector<8x128xf32>
    %70 = vector.extract_strided_slice %69 {offsets = [0, 0], sizes = [8, 96], strides = [1, 1]} : vector<8x128xf32> to vector<8x96xf32>
    %71 = arith.negf %70 : vector<8x96xf32>
    %72 = math.exp %71 : vector<8x96xf32>
    %cst_21 = arith.constant 1.000000e+00 : f32
    %73 = vector.broadcast %cst_21 : f32 to vector<8x96xf32>
    %74 = arith.addf %73, %72 : vector<8x96xf32>
    %75 = arith.divf %73, %74 : vector<8x96xf32>
    %76 = vector.extract_strided_slice %75 {offsets = [0, 0], sizes = [8, 32], strides = [1, 1]} : vector<8x96xf32> to vector<8x32xf32>
    %77 = vector.extract_strided_slice %75 {offsets = [0, 32], sizes = [8, 32], strides = [1, 1]} : vector<8x96xf32> to vector<8x32xf32>
    %78 = vector.extract_strided_slice %75 {offsets = [0, 64], sizes = [8, 32], strides = [1, 1]} : vector<8x96xf32> to vector<8x32xf32>
    %79 = vector.extract_strided_slice %69 {offsets = [0, 96], sizes = [8, 32], strides = [1, 1]} : vector<8x128xf32> to vector<8x32xf32>
    %80 = math.tanh %79 : vector<8x32xf32>
    %81 = arith.mulf %77, %63 : vector<8x32xf32>
    %82 = arith.mulf %76, %80 : vector<8x32xf32>
    %83 = arith.addf %81, %82 : vector<8x32xf32>
    %84 = math.tanh %83 : vector<8x32xf32>
    %85 = arith.mulf %78, %84 : vector<8x32xf32>
    %c4 = arith.constant 4 : index
    %c0_22 = arith.constant 0 : index
    %c0_23 = arith.constant 0 : index
    %86 = vector.load %arg2[%c4, %c0_22, %c0_23] : memref<8x8x128xf32, #tpu.memory_space<vmem>>, vector<1x8x128xf32>
    %87 = vector.shape_cast %86 : vector<1x8x128xf32> to vector<8x128xf32>
    %cst_24 = arith.constant dense<0.000000e+00> : vector<8x128xf32>
    %88 = tpu.matmul %85, %3, %cst_24 {dimension_numbers = #tpu.dot_dimension_numbers<[1], [0], [0], [1], [0, 0, 1, 1], [], []>} : vector<8x32xf32>, vector<32x128xf32>, vector<8x128xf32> -> vector<8x128xf32>
    %89 = arith.addf %87, %88 : vector<8x128xf32>
    %90 = vector.extract_strided_slice %89 {offsets = [0, 0], sizes = [8, 96], strides = [1, 1]} : vector<8x128xf32> to vector<8x96xf32>
    %91 = arith.negf %90 : vector<8x96xf32>
    %92 = math.exp %91 : vector<8x96xf32>
    %cst_25 = arith.constant 1.000000e+00 : f32
    %93 = vector.broadcast %cst_25 : f32 to vector<8x96xf32>
    %94 = arith.addf %93, %92 : vector<8x96xf32>
    %95 = arith.divf %93, %94 : vector<8x96xf32>
    %96 = vector.extract_strided_slice %95 {offsets = [0, 0], sizes = [8, 32], strides = [1, 1]} : vector<8x96xf32> to vector<8x32xf32>
    %97 = vector.extract_strided_slice %95 {offsets = [0, 32], sizes = [8, 32], strides = [1, 1]} : vector<8x96xf32> to vector<8x32xf32>
    %98 = vector.extract_strided_slice %95 {offsets = [0, 64], sizes = [8, 32], strides = [1, 1]} : vector<8x96xf32> to vector<8x32xf32>
    %99 = vector.extract_strided_slice %89 {offsets = [0, 96], sizes = [8, 32], strides = [1, 1]} : vector<8x128xf32> to vector<8x32xf32>
    %100 = math.tanh %99 : vector<8x32xf32>
    %101 = arith.mulf %97, %83 : vector<8x32xf32>
    %102 = arith.mulf %96, %100 : vector<8x32xf32>
    %103 = arith.addf %101, %102 : vector<8x32xf32>
    %104 = math.tanh %103 : vector<8x32xf32>
    %105 = arith.mulf %98, %104 : vector<8x32xf32>
    %c5 = arith.constant 5 : index
    %c0_26 = arith.constant 0 : index
    %c0_27 = arith.constant 0 : index
    %106 = vector.load %arg2[%c5, %c0_26, %c0_27] : memref<8x8x128xf32, #tpu.memory_space<vmem>>, vector<1x8x128xf32>
    %107 = vector.shape_cast %106 : vector<1x8x128xf32> to vector<8x128xf32>
    %cst_28 = arith.constant dense<0.000000e+00> : vector<8x128xf32>
    %108 = tpu.matmul %105, %3, %cst_28 {dimension_numbers = #tpu.dot_dimension_numbers<[1], [0], [0], [1], [0, 0, 1, 1], [], []>} : vector<8x32xf32>, vector<32x128xf32>, vector<8x128xf32> -> vector<8x128xf32>
    %109 = arith.addf %107, %108 : vector<8x128xf32>
    %110 = vector.extract_strided_slice %109 {offsets = [0, 0], sizes = [8, 96], strides = [1, 1]} : vector<8x128xf32> to vector<8x96xf32>
    %111 = arith.negf %110 : vector<8x96xf32>
    %112 = math.exp %111 : vector<8x96xf32>
    %cst_29 = arith.constant 1.000000e+00 : f32
    %113 = vector.broadcast %cst_29 : f32 to vector<8x96xf32>
    %114 = arith.addf %113, %112 : vector<8x96xf32>
    %115 = arith.divf %113, %114 : vector<8x96xf32>
    %116 = vector.extract_strided_slice %115 {offsets = [0, 0], sizes = [8, 32], strides = [1, 1]} : vector<8x96xf32> to vector<8x32xf32>
    %117 = vector.extract_strided_slice %115 {offsets = [0, 32], sizes = [8, 32], strides = [1, 1]} : vector<8x96xf32> to vector<8x32xf32>
    %118 = vector.extract_strided_slice %115 {offsets = [0, 64], sizes = [8, 32], strides = [1, 1]} : vector<8x96xf32> to vector<8x32xf32>
    %119 = vector.extract_strided_slice %109 {offsets = [0, 96], sizes = [8, 32], strides = [1, 1]} : vector<8x128xf32> to vector<8x32xf32>
    %120 = math.tanh %119 : vector<8x32xf32>
    %121 = arith.mulf %117, %103 : vector<8x32xf32>
    %122 = arith.mulf %116, %120 : vector<8x32xf32>
    %123 = arith.addf %121, %122 : vector<8x32xf32>
    %124 = math.tanh %123 : vector<8x32xf32>
    %125 = arith.mulf %118, %124 : vector<8x32xf32>
    %c6 = arith.constant 6 : index
    %c0_30 = arith.constant 0 : index
    %c0_31 = arith.constant 0 : index
    %126 = vector.load %arg2[%c6, %c0_30, %c0_31] : memref<8x8x128xf32, #tpu.memory_space<vmem>>, vector<1x8x128xf32>
    %127 = vector.shape_cast %126 : vector<1x8x128xf32> to vector<8x128xf32>
    %cst_32 = arith.constant dense<0.000000e+00> : vector<8x128xf32>
    %128 = tpu.matmul %125, %3, %cst_32 {dimension_numbers = #tpu.dot_dimension_numbers<[1], [0], [0], [1], [0, 0, 1, 1], [], []>} : vector<8x32xf32>, vector<32x128xf32>, vector<8x128xf32> -> vector<8x128xf32>
    %129 = arith.addf %127, %128 : vector<8x128xf32>
    %130 = vector.extract_strided_slice %129 {offsets = [0, 0], sizes = [8, 96], strides = [1, 1]} : vector<8x128xf32> to vector<8x96xf32>
    %131 = arith.negf %130 : vector<8x96xf32>
    %132 = math.exp %131 : vector<8x96xf32>
    %cst_33 = arith.constant 1.000000e+00 : f32
    %133 = vector.broadcast %cst_33 : f32 to vector<8x96xf32>
    %134 = arith.addf %133, %132 : vector<8x96xf32>
    %135 = arith.divf %133, %134 : vector<8x96xf32>
    %136 = vector.extract_strided_slice %135 {offsets = [0, 0], sizes = [8, 32], strides = [1, 1]} : vector<8x96xf32> to vector<8x32xf32>
    %137 = vector.extract_strided_slice %135 {offsets = [0, 32], sizes = [8, 32], strides = [1, 1]} : vector<8x96xf32> to vector<8x32xf32>
    %138 = vector.extract_strided_slice %135 {offsets = [0, 64], sizes = [8, 32], strides = [1, 1]} : vector<8x96xf32> to vector<8x32xf32>
    %139 = vector.extract_strided_slice %129 {offsets = [0, 96], sizes = [8, 32], strides = [1, 1]} : vector<8x128xf32> to vector<8x32xf32>
    %140 = math.tanh %139 : vector<8x32xf32>
    %141 = arith.mulf %137, %123 : vector<8x32xf32>
    %142 = arith.mulf %136, %140 : vector<8x32xf32>
    %143 = arith.addf %141, %142 : vector<8x32xf32>
    %144 = math.tanh %143 : vector<8x32xf32>
    %145 = arith.mulf %138, %144 : vector<8x32xf32>
    %c7 = arith.constant 7 : index
    %c0_34 = arith.constant 0 : index
    %c0_35 = arith.constant 0 : index
    %146 = vector.load %arg2[%c7, %c0_34, %c0_35] : memref<8x8x128xf32, #tpu.memory_space<vmem>>, vector<1x8x128xf32>
    %147 = vector.shape_cast %146 : vector<1x8x128xf32> to vector<8x128xf32>
    %cst_36 = arith.constant dense<0.000000e+00> : vector<8x128xf32>
    %148 = tpu.matmul %145, %3, %cst_36 {dimension_numbers = #tpu.dot_dimension_numbers<[1], [0], [0], [1], [0, 0, 1, 1], [], []>} : vector<8x32xf32>, vector<32x128xf32>, vector<8x128xf32> -> vector<8x128xf32>
    %149 = arith.addf %147, %148 : vector<8x128xf32>
    %150 = vector.extract_strided_slice %149 {offsets = [0, 0], sizes = [8, 96], strides = [1, 1]} : vector<8x128xf32> to vector<8x96xf32>
    %151 = arith.negf %150 : vector<8x96xf32>
    %152 = math.exp %151 : vector<8x96xf32>
    %cst_37 = arith.constant 1.000000e+00 : f32
    %153 = vector.broadcast %cst_37 : f32 to vector<8x96xf32>
    %154 = arith.addf %153, %152 : vector<8x96xf32>
    %155 = arith.divf %153, %154 : vector<8x96xf32>
    %156 = vector.extract_strided_slice %155 {offsets = [0, 0], sizes = [8, 32], strides = [1, 1]} : vector<8x96xf32> to vector<8x32xf32>
    %157 = vector.extract_strided_slice %155 {offsets = [0, 32], sizes = [8, 32], strides = [1, 1]} : vector<8x96xf32> to vector<8x32xf32>
    %158 = vector.extract_strided_slice %155 {offsets = [0, 64], sizes = [8, 32], strides = [1, 1]} : vector<8x96xf32> to vector<8x32xf32>
    %159 = vector.extract_strided_slice %149 {offsets = [0, 96], sizes = [8, 32], strides = [1, 1]} : vector<8x128xf32> to vector<8x32xf32>
    %160 = math.tanh %159 : vector<8x32xf32>
    %161 = arith.mulf %157, %143 : vector<8x32xf32>
    %162 = arith.mulf %156, %160 : vector<8x32xf32>
    %163 = arith.addf %161, %162 : vector<8x32xf32>
    %164 = math.tanh %163 : vector<8x32xf32>
    %165 = arith.mulf %158, %164 : vector<8x32xf32>
    %c0_38 = arith.constant 0 : index
    %c0_39 = arith.constant 0 : index
    %166 = vector.load %arg7[%c0_38, %c0_39] : memref<8x32xf32, #tpu.memory_space<vmem>>, vector<8x32xf32>
    tpu.vector_store %arg7[%c0_38, %c0_39], %165 {strides = array<i32>} : memref<8x32xf32, #tpu.memory_space<vmem>>, vector<8x32xf32>,
    %c0_40 = arith.constant 0 : index
    %c0_41 = arith.constant 0 : index
    %167 = vector.load %arg8[%c0_40, %c0_41] : memref<8x32xf32, #tpu.memory_space<vmem>>, vector<8x32xf32>
    tpu.vector_store %arg8[%c0_40, %c0_41], %163 {strides = array<i32>} : memref<8x32xf32, #tpu.memory_space<vmem>>, vector<8x32xf32>,
    %c0_i32_42 = arith.constant 0 : i32
    %168 = arith.cmpi eq, %arg1, %c0_i32_42 : i32
    %169 = arith.extui %168 : i1 to i32
    %c0_i32_43 = arith.constant 0 : i32
    %170 = arith.cmpi ne, %169, %c0_i32_43 : i32
    scf.if %170 {
      %c0_44 = arith.constant 0 : index
      %c0_45 = arith.constant 0 : index
      %171 = vector.load %arg4[%c0_44, %c0_45] : memref<32x128xf32, #tpu.memory_space<vmem>>, vector<32x128xf32>
      %cst_46 = arith.constant dense<0.000000e+00> : vector<8x128xf32>
      %172 = tpu.matmul %165, %171, %cst_46 {dimension_numbers = #tpu.dot_dimension_numbers<[1], [0], [0], [1], [0, 0, 1, 1], [], []>} : vector<8x32xf32>, vector<32x128xf32>, vector<8x128xf32> -> vector<8x128xf32>
      %c0_47 = arith.constant 0 : index
      %c0_48 = arith.constant 0 : index
      %173 = vector.load %arg5[%c0_47, %c0_48] : memref<1x128xf32, #tpu.memory_space<vmem>>, vector<1x128xf32>
      %174 = vector.broadcast %173 : vector<1x128xf32> to vector<8x128xf32>
      %175 = arith.addf %172, %174 : vector<8x128xf32>
      %c0_49 = arith.constant 0 : index
      %c0_50 = arith.constant 0 : index
      %176 = vector.load %arg6[%c0_49, %c0_50] : memref<8x128xf32, #tpu.memory_space<vmem>>, vector<8x128xf32>
      tpu.vector_store %arg6[%c0_49, %c0_50], %175 {strides = array<i32>} : memref<8x128xf32, #tpu.memory_space<vmem>>, vector<8x128xf32>,
    } else {
    }
    return
  }
  func.func @transform_0(%arg0: i32, %arg1: i32) -> (i32, i32, i32) {
    %c0_i32 = arith.constant 0 : i32
    %c0_i32_0 = arith.constant 0 : i32
    return %arg1, %arg0, %c0_i32 : i32, i32, i32
  }
  func.func @transform_1(%arg0: i32, %arg1: i32) -> (i32, i32) {
    %c0_i32 = arith.constant 0 : i32
    %c0_i32_0 = arith.constant 0 : i32
    %c0_i32_1 = arith.constant 0 : i32
    return %c0_i32, %c0_i32_0 : i32, i32
  }
  func.func @transform_2(%arg0: i32, %arg1: i32) -> (i32, i32) {
    %c0_i32 = arith.constant 0 : i32
    %c0_i32_0 = arith.constant 0 : i32
    %c0_i32_1 = arith.constant 0 : i32
    return %c0_i32, %c0_i32_0 : i32, i32
  }
  func.func @transform_3(%arg0: i32, %arg1: i32) -> (i32, i32) {
    %c0_i32 = arith.constant 0 : i32
    %c0_i32_0 = arith.constant 0 : i32
    %c0_i32_1 = arith.constant 0 : i32
    return %c0_i32, %c0_i32_0 : i32, i32
  }
  func.func @transform_4(%arg0: i32, %arg1: i32) -> (i32, i32) {
    %c0_i32 = arith.constant 0 : i32
    %c0_i32_0 = arith.constant 0 : i32
    return %arg0, %c0_i32 : i32, i32
  }
}

</mosaic_0001>

<llo_original>
// kernel: tpu_custom_call.1
$region0: #{tpu_custom_call.1}
  #allocation0 [shape = 'u32[]', space=smem, size = 0x4, offset = 0x4, fixed_abs, tag = 'smem constant byte address 0x4 - core index']
  #allocation1 [shape = 'u32[144,128]{1,0:T(1,128)}', space=vmem, size = 0x12000, scoped, tag = 'internal scratch']
  #allocation2 [shape = 'f32[8,32]{1,0:T(8,128)}', space=vmem, size = 0x1000, scoped, tag = 'scratch operand']
  #allocation3 [shape = 'f32[8,32]{1,0:T(8,128)}', space=vmem, size = 0x1000, scoped, tag = 'scratch operand']
  %s0 = inlined_call_operand.hbm [shape: f32[8,8,128], index: 0, kind: input, shape index: {}]
  %s1 = inlined_call_operand.hbm [shape: f32[32,128], index: 1, kind: input, shape index: {}]
  %s2 = inlined_call_operand.hbm [shape: f32[32,128], index: 2, kind: input, shape index: {}]
  %s3 = inlined_call_operand.vmem [shape: f32[1,128], index: 3, kind: input, shape index: {}]
  %s4 = inlined_call_operand.hbm [shape: f32[8,128], index: 4, kind: output, shape index: {}]
  %s5 = sld [smem:[#allocation0]]
  $region46: #{tpu_custom_call.1} parent=0
    _
  %s7 = ssub.s32 1, %s5
  %s8 = scalar_select 0, %s7, %s5
  $region1: #{tpu_custom_call.1} parent=0
    #allocation4 [shape = 'u8[32768]{0}', space=vmem, size = 0x8000, scoped, tag = 'input window, operand 0, single buffered']
    #allocation5 [shape = 's32[1]{0}', space=sflag, size = 0x4, scoped, tag = 'scoped memory for tpu_custom_call.1']
    #allocation6 [shape = 's32[1]{0}', space=sflag, size = 0x4, scoped, tag = 'scoped memory for tpu_custom_call.1']
    #allocation7 [shape = 'u8[16384]{0}', space=vmem, size = 0x4000, scoped, tag = 'input window, operand 1, single buffered']
    #allocation8 [shape = 's32[1]{0}', space=sflag, size = 0x4, scoped, tag = 'scoped memory for tpu_custom_call.1']
    #allocation9 [shape = 'u8[16384]{0}', space=vmem, size = 0x4000, scoped, tag = 'input window, operand 2, single buffered']
    #allocation10 [shape = 'u8[4096]{0}', space=vmem, size = 0x1000, scoped, tag = 'output window, operand 0, single buffered']
    %9 = vsyncpa [#allocation5], 0
    %10 = vsyncpa [#allocation8], 0
    %11 = vsyncpa [#allocation6], 0
    // Predicated region
    $region2: #{tpu_custom_call.1} parent=1 // pred_check
      _
    $region3: #{tpu_custom_call.1} parent=1 // pred_check_branch
      %13 = sbr.rel (0) target = $region5
    $region4: #{tpu_custom_call.1} parent=1 // pred_region
      %s15 = ssub.s32 1024, 1024
      %16 = vsyncadd [#allocation5], %s15
      %s17 = sshll.u32 [#allocation4], 4
      %s18 = int_to_ptr.vmem [resolvable:$true] %s17
      %23 = dma.hbm_to_vmem [thread:$0]  %s0, 1024, %s18, [#allocation5], 128, 128, 8
    $region5: #{tpu_custom_call.1} parent=1 // pred_fallthru
      _
    // Predicated region
    $region6: #{tpu_custom_call.1} parent=1 // pred_check
      _
    $region7: #{tpu_custom_call.1} parent=1 // pred_check_branch
      %25 = sbr.rel (0) target = $region9
    $region8: #{tpu_custom_call.1} parent=1 // pred_region
      %s27 = ssub.s32 512, 512
      %28 = vsyncadd [#allocation8], %s27
      %s29 = sshll.u32 [#allocation7], 4
      %s30 = int_to_ptr.vmem [resolvable:$true] %s29
      %35 = dma.hbm_to_vmem [thread:$0]  %s1, 512, %s30, [#allocation8], 128, 128, 8
    $region9: #{tpu_custom_call.1} parent=1 // pred_fallthru
      _
    // Predicated region
    $region10: #{tpu_custom_call.1} parent=1 // pred_check
      _
    $region11: #{tpu_custom_call.1} parent=1 // pred_check_branch
      %37 = sbr.rel (0) target = $region13
    $region12: #{tpu_custom_call.1} parent=1 // pred_region
      %s39 = ssub.s32 512, 512
      %40 = vsyncadd [#allocation8], %s39
      %s41 = sshll.u32 [#allocation9], 4
      %s42 = int_to_ptr.vmem [resolvable:$true] %s41
      %47 = dma.hbm_to_vmem [thread:$0]  %s2, 512, %s42, [#allocation8], 128, 128, 8
    $region13: #{tpu_custom_call.1} parent=1 // pred_fallthru
      _
    // Predicated region
    $region14: #{tpu_custom_call.1} parent=1 // pred_check
      _
    $region15: #{tpu_custom_call.1} parent=1 // pred_check_branch
      %49 = sbr.rel (0) target = $region17
    $region16: #{tpu_custom_call.1} parent=1 // pred_region
      _
    $region17: #{tpu_custom_call.1} parent=1 // pred_fallthru
      _
    // Predicated region
    $region18: #{tpu_custom_call.1} parent=1 // pred_check
      _
    $region19: #{tpu_custom_call.1} parent=1 // pred_check_branch
      %51 = sbr.rel (0) target = $region21
    $region20: #{tpu_custom_call.1} parent=1 // pred_region
      %52 = dma.done [#allocation5], 1024
    $region21: #{tpu_custom_call.1} parent=1 // pred_fallthru
      _
    // Predicated region
    $region22: #{tpu_custom_call.1} parent=1 // pred_check
      _
    $region23: #{tpu_custom_call.1} parent=1 // pred_check_branch
      %54 = sbr.rel (0) target = $region25
    $region24: #{tpu_custom_call.1} parent=1 // pred_region
      %55 = dma.done [#allocation8], 512
    $region25: #{tpu_custom_call.1} parent=1 // pred_fallthru
      _
    // Predicated region
    $region26: #{tpu_custom_call.1} parent=1 // pred_check
      _
    $region27: #{tpu_custom_call.1} parent=1 // pred_check_branch
      %57 = sbr.rel (0) target = $region29
    $region28: #{tpu_custom_call.1} parent=1 // pred_region
      %58 = dma.done [#allocation8], 512
    $region29: #{tpu_custom_call.1} parent=1 // pred_fallthru
      _
    %p59 = scmp.eq.s32.totalorder 0, 0
    // Predicated region
    $region30: #{tpu_custom_call.1} parent=1 // pred_check
      %p60 = pneg %p59
    $region31: #{tpu_custom_call.1} parent=1 // pred_check_branch
      %62 = sbr.rel (%p60) target = $region33
    $region32: #{tpu_custom_call.1} parent=1 // pred_region
      %vm63 = vcmask 261120
      %64 = vst.msk [vmem:[#allocation2] sm:$0xff] %vm63, 0.0
      %65 = vst.msk [vmem:[#allocation3] sm:$0xff] %vm63, 0.0
    $region33: #{tpu_custom_call.1} parent=1 // pred_fallthru
      _
    %v66 = vld [vmem:[#allocation7] sm:$0xff]
    %v67 = vld [vmem:[#allocation7 + $0x8] sm:$0xff]
    %v68 = vld [vmem:[#allocation7 + $0x10] sm:$0xff]
    %v69 = vld [vmem:[#allocation7 + $0x18] sm:$0xff]
    %v70 = vld [vmem:[#allocation2] sm:$0xff]
    %v71 = vld [vmem:[#allocation3] sm:$0xff]
    %v72 = vld [vmem:[#allocation4] sm:$0xff]
    %vm73 = vcmask 261120
    %v75 = vsel %vm73, %v70, 0
    %77 = vmatprep.subr.mxu0 0.0
    %78 = vmatpush1.msra.mxu0 0.0
    %79 = vmatprep.subr.mxu0 0.0
    %80 = vmatpush1.msra.mxu0 0.0
    %81 = vmatprep.subr.mxu0 0.0
    %82 = vmatpush1.msra.mxu0 0.0
    %83 = vmatprep.subr.mxu0 0.0
    %84 = vmatpush1.msra.mxu0 0.0
    %85 = vmatprep.subr.mxu0 0.0
    %86 = vmatpush1.msra.mxu0 0.0
    %87 = vmatprep.subr.mxu0 0.0
    %88 = vmatpush1.msra.mxu0 0.0
    %89 = vmatprep.subr.mxu0 0.0
    %90 = vmatpush1.msra.mxu0 0.0
    %91 = vmatprep.subr.mxu0 0.0
    %92 = vmatpush1.msra.mxu0 0.0
    %93 = vmatprep.subr.mxu0 0.0
    %94 = vmatpush1.msra.mxu0 0.0
    %95 = vmatprep.subr.mxu0 0.0
    %96 = vmatpush1.msra.mxu0 0.0
    %97 = vmatprep.subr.mxu0 0.0
    %98 = vmatpush1.msra.mxu0 0.0
    %99 = vmatprep.subr.mxu0 0.0
    %100 = vmatpush1.msra.mxu0 0.0
    %101 = vmatprep.subr.mxu0 0.0
    %102 = vmatpush1.msra.mxu0 %v69
    %103 = vmatprep.subr.mxu0 0.0
    %104 = vmatpush1.msra.mxu0 %v68
    %105 = vmatprep.subr.mxu0 0.0
    %106 = vmatpush1.msra.mxu0 %v67
    %107 = vmatprep.subr.mxu0 0.0
    %108 = vmatpush1.msra.mxu0 %v66
    %109 = vmatprep.subr.mxu0 0.0
    %110 = vmatpush2.msra.mxu0 0.0
    %111 = vmatprep.subr.mxu0 0.0
    %112 = vmatpush2.msra.mxu0 0.0
    %113 = vmatprep.subr.mxu0 0.0
    %114 = vmatpush2.msra.mxu0 0.0
    %115 = vmatprep.subr.mxu0 0.0
    %116 = vmatpush2.msra.mxu0 0.0
    %117 = vmatprep.subr.mxu0 0.0
    %118 = vmatpush2.msra.mxu0 0.0
    %119 = vmatprep.subr.mxu0 0.0
    %120 = vmatpush2.msra.mxu0 0.0
    %121 = vmatprep.subr.mxu0 0.0
    %122 = vmatpush2.msra.mxu0 0.0
    %123 = vmatprep.subr.mxu0 0.0
    %124 = vmatpush2.msra.mxu0 0.0
    %125 = vmatprep.subr.mxu0 0.0
    %126 = vmatpush2.msra.mxu0 0.0
    %127 = vmatprep.subr.mxu0 0.0
    %128 = vmatpush2.msra.mxu0 0.0
    %129 = vmatprep.subr.mxu0 0.0
    %130 = vmatpush2.msra.mxu0 0.0
    %131 = vmatprep.subr.mxu0 0.0
    %132 = vmatpush2.msra.mxu0 0.0
    %133 = vmatprep.subr.mxu0 0.0
    %134 = vmatpush2.msra.mxu0 0.0
    %135 = vmatprep.subr.mxu0 0.0
    %136 = vmatpush2.msra.mxu0 0.0
    %137 = vmatprep.subr.mxu0 0.0
    %138 = vmatpush2.msra.mxu0 0.0
    %139 = vmatprep.subr.mxu0 0.0
    %140 = vmatpush2.msra.mxu0 0.0
    %141 = vmatprep.mubr.f32.mxu0 0.0
    %142 = vmatmul.mubr.f32.gmra.mxu0 %v75
    %v143 = vpop.f32.mrf.mxu0
    %v144 = vadd.f32 0.0, %v143
    %v145 = vpop.f32.mrf.mxu0
    %146 = vdwg.mxu0
    %v147 = vadd.f32 %v72, %v144
    %v148 = vxor.u32 %v147, 2147483648
    %v149 = vmul.f32 %v148, 1.442695
    %v150 = vpow.pop %v149
    %v151 = vadd.f32 %v150, 1.0
    %v152 = vrcp.pop %v151
    %v153 = vmul.f32 1.0, %v152
    %v154 = vtanh.pop %v147
    %156 = vrot.lane.b32.xlu0 %v71, 32
    %v157 = vpop.permute.xlu0 %156
    %v159 = vmul.f32 %v153, %v157
    %161 = vrot.lane.b32.xlu0 %v154, 32
    %v162 = vpop.permute.xlu0 %161
    %v164 = vmul.f32 %v153, %v162
    %166 = vrot.lane.b32.xlu0 %v164, 32
    %v167 = vpop.permute.xlu0 %166
    %v169 = vadd.f32 %v159, %v167
    %v170 = vtanh.pop %v169
    %172 = vrot.lane.b32.xlu0 %v170, 32
    %v173 = vpop.permute.xlu0 %172
    %v175 = vmul.f32 %v153, %v173
    %s176 = scalar_lea.vmem [#allocation4], 8
    %v177 = vld [vmem:[%s176] sm:$0xff]
    %179 = vrot.lane.b32.xlu0 %v175, 64
    %v180 = vpop.permute.xlu0 %179
    %v181 = vsel %vm73, %v180, 0
    %183 = vmatprep.subr.mxu0 0.0
    %184 = vmatpush1.msra.mxu0 0.0
    %185 = vmatprep.subr.mxu0 0.0
    %186 = vmatpush1.msra.mxu0 0.0
    %187 = vmatprep.subr.mxu0 0.0
    %188 = vmatpush1.msra.mxu0 0.0
    %189 = vmatprep.subr.mxu0 0.0
    %190 = vmatpush1.msra.mxu0 0.0
    %191 = vmatprep.subr.mxu0 0.0
    %192 = vmatpush1.msra.mxu0 0.0
    %193 = vmatprep.subr.mxu0 0.0
    %194 = vmatpush1.msra.mxu0 0.0
    %195 = vmatprep.subr.mxu0 0.0
    %196 = vmatpush1.msra.mxu0 0.0
    %197 = vmatprep.subr.mxu0 0.0
    %198 = vmatpush1.msra.mxu0 0.0
    %199 = vmatprep.subr.mxu0 0.0
    %200 = vmatpush1.msra.mxu0 0.0
    %201 = vmatprep.subr.mxu0 0.0
    %202 = vmatpush1.msra.mxu0 0.0
    %203 = vmatprep.subr.mxu0 0.0
    %204 = vmatpush1.msra.mxu0 0.0
    %205 = vmatprep.subr.mxu0 0.0
    %206 = vmatpush1.msra.mxu0 0.0
    %207 = vmatprep.subr.mxu0 0.0
    %208 = vmatpush1.msra.mxu0 %v69
    %209 = vmatprep.subr.mxu0 0.0
    %210 = vmatpush1.msra.mxu0 %v68
    %211 = vmatprep.subr.mxu0 0.0
    %212 = vmatpush1.msra.mxu0 %v67
    %213 = vmatprep.subr.mxu0 0.0
    %214 = vmatpush1.msra.mxu0 %v66
    %215 = vmatprep.subr.mxu0 0.0
    %216 = vmatpush2.msra.mxu0 0.0
    %217 = vmatprep.subr.mxu0 0.0
    %218 = vmatpush2.msra.mxu0 0.0
    %219 = vmatprep.subr.mxu0 0.0
    %220 = vmatpush2.msra.mxu0 0.0
    %221 = vmatprep.subr.mxu0 0.0
    %222 = vmatpush2.msra.mxu0 0.0
    %223 = vmatprep.subr.mxu0 0.0
    %224 = vmatpush2.msra.mxu0 0.0
    %225 = vmatprep.subr.mxu0 0.0
    %226 = vmatpush2.msra.mxu0 0.0
    %227 = vmatprep.subr.mxu0 0.0
    %228 = vmatpush2.msra.mxu0 0.0
    %229 = vmatprep.subr.mxu0 0.0
    %230 = vmatpush2.msra.mxu0 0.0
    %231 = vmatprep.subr.mxu0 0.0
    %232 = vmatpush2.msra.mxu0 0.0
    %233 = vmatprep.subr.mxu0 0.0
    %234 = vmatpush2.msra.mxu0 0.0
    %235 = vmatprep.subr.mxu0 0.0
    %236 = vmatpush2.msra.mxu0 0.0
    %237 = vmatprep.subr.mxu0 0.0
    %238 = vmatpush2.msra.mxu0 0.0
    %239 = vmatprep.subr.mxu0 0.0
    %240 = vmatpush2.msra.mxu0 0.0
    %241 = vmatprep.subr.mxu0 0.0
    %242 = vmatpush2.msra.mxu0 0.0
    %243 = vmatprep.subr.mxu0 0.0
    %244 = vmatpush2.msra.mxu0 0.0
    %245 = vmatprep.subr.mxu0 0.0
    %246 = vmatpush2.msra.mxu0 0.0
    %247 = vmatprep.mubr.f32.mxu0 0.0
    %248 = vmatmul.mubr.f32.gmra.mxu0 %v181
    %v249 = vpop.f32.mrf.mxu0
    %v250 = vadd.f32 0.0, %v249
    %v251 = vpop.f32.mrf.mxu0
    %252 = vdwg.mxu0
    %v253 = vadd.f32 %v177, %v250
    %v254 = vxor.u32 %v253, 2147483648
    %v255 = vmul.f32 %v254, 1.442695
    %v256 = vpow.pop %v255
    %v257 = vadd.f32 %v256, 1.0
    %v258 = vrcp.pop %v257
    %v259 = vmul.f32 1.0, %v258
    %v260 = vtanh.pop %v253
    %v261 = vmul.f32 %v259, %v169
    %263 = vrot.lane.b32.xlu0 %v260, 32
    %v264 = vpop.permute.xlu0 %263
    %v266 = vmul.f32 %v259, %v264
    %268 = vrot.lane.b32.xlu0 %v266, 32
    %v269 = vpop.permute.xlu0 %268
    %v271 = vadd.f32 %v261, %v269
    %v272 = vtanh.pop %v271
    %274 = vrot.lane.b32.xlu0 %v272, 32
    %v275 = vpop.permute.xlu0 %274
    %v277 = vmul.f32 %v259, %v275
    %s278 = scalar_lea.vmem [#allocation4], 16
    %v279 = vld [vmem:[%s278] sm:$0xff]
    %281 = vrot.lane.b32.xlu0 %v277, 64
    %v282 = vpop.permute.xlu0 %281
    %v283 = vsel %vm73, %v282, 0
    %285 = vmatprep.subr.mxu0 0.0
    %286 = vmatpush1.msra.mxu0 0.0
    %287 = vmatprep.subr.mxu0 0.0
    %288 = vmatpush1.msra.mxu0 0.0
    %289 = vmatprep.subr.mxu0 0.0
    %290 = vmatpush1.msra.mxu0 0.0
    %291 = vmatprep.subr.mxu0 0.0
    %292 = vmatpush1.msra.mxu0 0.0
    %293 = vmatprep.subr.mxu0 0.0
    %294 = vmatpush1.msra.mxu0 0.0
    %295 = vmatprep.subr.mxu0 0.0
    %296 = vmatpush1.msra.mxu0 0.0
    %297 = vmatprep.subr.mxu0 0.0
    %298 = vmatpush1.msra.mxu0 0.0
    %299 = vmatprep.subr.mxu0 0.0
    %300 = vmatpush1.msra.mxu0 0.0
    %301 = vmatprep.subr.mxu0 0.0
    %302 = vmatpush1.msra.mxu0 0.0
    %303 = vmatprep.subr.mxu0 0.0
    %304 = vmatpush1.msra.mxu0 0.0
    %305 = vmatprep.subr.mxu0 0.0
    %306 = vmatpush1.msra.mxu0 0.0
    %307 = vmatprep.subr.mxu0 0.0
    %308 = vmatpush1.msra.mxu0 0.0
    %309 = vmatprep.subr.mxu0 0.0
    %310 = vmatpush1.msra.mxu0 %v69
    %311 = vmatprep.subr.mxu0 0.0
    %312 = vmatpush1.msra.mxu0 %v68
    %313 = vmatprep.subr.mxu0 0.0
    %314 = vmatpush1.msra.mxu0 %v67
    %315 = vmatprep.subr.mxu0 0.0
    %316 = vmatpush1.msra.mxu0 %v66
    %317 = vmatprep.subr.mxu0 0.0
    %318 = vmatpush2.msra.mxu0 0.0
    %319 = vmatprep.subr.mxu0 0.0
    %320 = vmatpush2.msra.mxu0 0.0
    %321 = vmatprep.subr.mxu0 0.0
    %322 = vmatpush2.msra.mxu0 0.0
    %323 = vmatprep.subr.mxu0 0.0
    %324 = vmatpush2.msra.mxu0 0.0
    %325 = vmatprep.subr.mxu0 0.0
    %326 = vmatpush2.msra.mxu0 0.0
    %327 = vmatprep.subr.mxu0 0.0
    %328 = vmatpush2.msra.mxu0 0.0
    %329 = vmatprep.subr.mxu0 0.0
    %330 = vmatpush2.msra.mxu0 0.0
    %331 = vmatprep.subr.mxu0 0.0
    %332 = vmatpush2.msra.mxu0 0.0
    %333 = vmatprep.subr.mxu0 0.0
    %334 = vmatpush2.msra.mxu0 0.0
    %335 = vmatprep.subr.mxu0 0.0
    %336 = vmatpush2.msra.mxu0 0.0
    %337 = vmatprep.subr.mxu0 0.0
    %338 = vmatpush2.msra.mxu0 0.0
    %339 = vmatprep.subr.mxu0 0.0
    %340 = vmatpush2.msra.mxu0 0.0
    %341 = vmatprep.subr.mxu0 0.0
    %342 = vmatpush2.msra.mxu0 0.0
    %343 = vmatprep.subr.mxu0 0.0
    %344 = vmatpush2.msra.mxu0 0.0
    %345 = vmatprep.subr.mxu0 0.0
    %346 = vmatpush2.msra.mxu0 0.0
    %347 = vmatprep.subr.mxu0 0.0
    %348 = vmatpush2.msra.mxu0 0.0
    %349 = vmatprep.mubr.f32.mxu0 0.0
    %350 = vmatmul.mubr.f32.gmra.mxu0 %v283
    %v351 = vpop.f32.mrf.mxu0
    %v352 = vadd.f32 0.0, %v351
    %v353 = vpop.f32.mrf.mxu0
    %354 = vdwg.mxu0
    %v355 = vadd.f32 %v279, %v352
    %v356 = vxor.u32 %v355, 2147483648
    %v357 = vmul.f32 %v356, 1.442695
    %v358 = vpow.pop %v357
    %v359 = vadd.f32 %v358, 1.0
    %v360 = vrcp.pop %v359
    %v361 = vmul.f32 1.0, %v360
    %v362 = vtanh.pop %v355
    %v363 = vmul.f32 %v361, %v271
    %365 = vrot.lane.b32.xlu0 %v362, 32
    %v366 = vpop.permute.xlu0 %365
    %v368 = vmul.f32 %v361, %v366
    %370 = vrot.lane.b32.xlu0 %v368, 32
    %v371 = vpop.permute.xlu0 %370
    %v373 = vadd.f32 %v363, %v371
    %v374 = vtanh.pop %v373
    %376 = vrot.lane.b32.xlu0 %v374, 32
    %v377 = vpop.permute.xlu0 %376
    %v379 = vmul.f32 %v361, %v377
    %s380 = scalar_lea.vmem [#allocation4], 24
    %v381 = vld [vmem:[%s380] sm:$0xff]
    %383 = vrot.lane.b32.xlu0 %v379, 64
    %v384 = vpop.permute.xlu0 %383
    %v385 = vsel %vm73, %v384, 0
    %387 = vmatprep.subr.mxu0 0.0
    %388 = vmatpush1.msra.mxu0 0.0
    %389 = vmatprep.subr.mxu0 0.0
    %390 = vmatpush1.msra.mxu0 0.0
    %391 = vmatprep.subr.mxu0 0.0
    %392 = vmatpush1.msra.mxu0 0.0
    %393 = vmatprep.subr.mxu0 0.0
    %394 = vmatpush1.msra.mxu0 0.0
    %395 = vmatprep.subr.mxu0 0.0
    %396 = vmatpush1.msra.mxu0 0.0
    %397 = vmatprep.subr.mxu0 0.0
    %398 = vmatpush1.msra.mxu0 0.0
    %399 = vmatprep.subr.mxu0 0.0
    %400 = vmatpush1.msra.mxu0 0.0
    %401 = vmatprep.subr.mxu0 0.0
    %402 = vmatpush1.msra.mxu0 0.0
    %403 = vmatprep.subr.mxu0 0.0
    %404 = vmatpush1.msra.mxu0 0.0
    %405 = vmatprep.subr.mxu0 0.0
    %406 = vmatpush1.msra.mxu0 0.0
    %407 = vmatprep.subr.mxu0 0.0
    %408 = vmatpush1.msra.mxu0 0.0
    %409 = vmatprep.subr.mxu0 0.0
    %410 = vmatpush1.msra.mxu0 0.0
    %411 = vmatprep.subr.mxu0 0.0
    %412 = vmatpush1.msra.mxu0 %v69
    %413 = vmatprep.subr.mxu0 0.0
    %414 = vmatpush1.msra.mxu0 %v68
    %415 = vmatprep.subr.mxu0 0.0
    %416 = vmatpush1.msra.mxu0 %v67
    %417 = vmatprep.subr.mxu0 0.0
    %418 = vmatpush1.msra.mxu0 %v66
    %419 = vmatprep.subr.mxu0 0.0
    %420 = vmatpush2.msra.mxu0 0.0
    %421 = vmatprep.subr.mxu0 0.0
    %422 = vmatpush2.msra.mxu0 0.0
    %423 = vmatprep.subr.mxu0 0.0
    %424 = vmatpush2.msra.mxu0 0.0
    %425 = vmatprep.subr.mxu0 0.0
    %426 = vmatpush2.msra.mxu0 0.0
    %427 = vmatprep.subr.mxu0 0.0
    %428 = vmatpush2.msra.mxu0 0.0
    %429 = vmatprep.subr.mxu0 0.0
    %430 = vmatpush2.msra.mxu0 0.0
    %431 = vmatprep.subr.mxu0 0.0
    %432 = vmatpush2.msra.mxu0 0.0
    %433 = vmatprep.subr.mxu0 0.0
    %434 = vmatpush2.msra.mxu0 0.0
    %435 = vmatprep.subr.mxu0 0.0
    %436 = vmatpush2.msra.mxu0 0.0
    %437 = vmatprep.subr.mxu0 0.0
    %438 = vmatpush2.msra.mxu0 0.0
    %439 = vmatprep.subr.mxu0 0.0
    %440 = vmatpush2.msra.mxu0 0.0
    %441 = vmatprep.subr.mxu0 0.0
    %442 = vmatpush2.msra.mxu0 0.0
    %443 = vmatprep.subr.mxu0 0.0
    %444 = vmatpush2.msra.mxu0 0.0
    %445 = vmatprep.subr.mxu0 0.0
    %446 = vmatpush2.msra.mxu0 0.0
    %447 = vmatprep.subr.mxu0 0.0
    %448 = vmatpush2.msra.mxu0 0.0
    %449 = vmatprep.subr.mxu0 0.0
    %450 = vmatpush2.msra.mxu0 0.0
    %451 = vmatprep.mubr.f32.mxu0 0.0
    %452 = vmatmul.mubr.f32.gmra.mxu0 %v385
    %v453 = vpop.f32.mrf.mxu0
    %v454 = vadd.f32 0.0, %v453
    %v455 = vpop.f32.mrf.mxu0
    %456 = vdwg.mxu0
    %v457 = vadd.f32 %v381, %v454
    %v458 = vxor.u32 %v457, 2147483648
    %v459 = vmul.f32 %v458, 1.442695
    %v460 = vpow.pop %v459
    %v461 = vadd.f32 %v460, 1.0
    %v462 = vrcp.pop %v461
    %v463 = vmul.f32 1.0, %v462
    %v464 = vtanh.pop %v457
    %v465 = vmul.f32 %v463, %v373
    %467 = vrot.lane.b32.xlu0 %v464, 32
    %v468 = vpop.permute.xlu0 %467
    %v470 = vmul.f32 %v463, %v468
    %472 = vrot.lane.b32.xlu0 %v470, 32
    %v473 = vpop.permute.xlu0 %472
    %v475 = vadd.f32 %v465, %v473
    %v476 = vtanh.pop %v475
    %478 = vrot.lane.b32.xlu0 %v476, 32
    %v479 = vpop.permute.xlu0 %478
    %v481 = vmul.f32 %v463, %v479
    %s482 = scalar_lea.vmem [#allocation4], 32
    %v483 = vld [vmem:[%s482] sm:$0xff]
    %485 = vrot.lane.b32.xlu0 %v481, 64
    %v486 = vpop.permute.xlu0 %485
    %v487 = vsel %vm73, %v486, 0
    %489 = vmatprep.subr.mxu0 0.0
    %490 = vmatpush1.msra.mxu0 0.0
    %491 = vmatprep.subr.mxu0 0.0
    %492 = vmatpush1.msra.mxu0 0.0
    %493 = vmatprep.subr.mxu0 0.0
    %494 = vmatpush1.msra.mxu0 0.0
    %495 = vmatprep.subr.mxu0 0.0
    %496 = vmatpush1.msra.mxu0 0.0
    %497 = vmatprep.subr.mxu0 0.0
    %498 = vmatpush1.msra.mxu0 0.0
    %499 = vmatprep.subr.mxu0 0.0
    %500 = vmatpush1.msra.mxu0 0.0
    %501 = vmatprep.subr.mxu0 0.0
    %502 = vmatpush1.msra.mxu0 0.0
    %503 = vmatprep.subr.mxu0 0.0
    %504 = vmatpush1.msra.mxu0 0.0
    %505 = vmatprep.subr.mxu0 0.0
    %506 = vmatpush1.msra.mxu0 0.0
    %507 = vmatprep.subr.mxu0 0.0
    %508 = vmatpush1.msra.mxu0 0.0
    %509 = vmatprep.subr.mxu0 0.0
    %510 = vmatpush1.msra.mxu0 0.0
    %511 = vmatprep.subr.mxu0 0.0
    %512 = vmatpush1.msra.mxu0 0.0
    %513 = vmatprep.subr.mxu0 0.0
    %514 = vmatpush1.msra.mxu0 %v69
    %515 = vmatprep.subr.mxu0 0.0
    %516 = vmatpush1.msra.mxu0 %v68
    %517 = vmatprep.subr.mxu0 0.0
    %518 = vmatpush1.msra.mxu0 %v67
    %519 = vmatprep.subr.mxu0 0.0
    %520 = vmatpush1.msra.mxu0 %v66
    %521 = vmatprep.subr.mxu0 0.0
    %522 = vmatpush2.msra.mxu0 0.0
    %523 = vmatprep.subr.mxu0 0.0
    %524 = vmatpush2.msra.mxu0 0.0
    %525 = vmatprep.subr.mxu0 0.0
    %526 = vmatpush2.msra.mxu0 0.0
    %527 = vmatprep.subr.mxu0 0.0
    %528 = vmatpush2.msra.mxu0 0.0
    %529 = vmatprep.subr.mxu0 0.0
    %530 = vmatpush2.msra.mxu0 0.0
    %531 = vmatprep.subr.mxu0 0.0
    %532 = vmatpush2.msra.mxu0 0.0
    %533 = vmatprep.subr.mxu0 0.0
    %534 = vmatpush2.msra.mxu0 0.0
    %535 = vmatprep.subr.mxu0 0.0
    %536 = vmatpush2.msra.mxu0 0.0
    %537 = vmatprep.subr.mxu0 0.0
    %538 = vmatpush2.msra.mxu0 0.0
    %539 = vmatprep.subr.mxu0 0.0
    %540 = vmatpush2.msra.mxu0 0.0
    %541 = vmatprep.subr.mxu0 0.0
    %542 = vmatpush2.msra.mxu0 0.0
    %543 = vmatprep.subr.mxu0 0.0
    %544 = vmatpush2.msra.mxu0 0.0
    %545 = vmatprep.subr.mxu0 0.0
    %546 = vmatpush2.msra.mxu0 0.0
    %547 = vmatprep.subr.mxu0 0.0
    %548 = vmatpush2.msra.mxu0 0.0
    %549 = vmatprep.subr.mxu0 0.0
    %550 = vmatpush2.msra.mxu0 0.0
    %551 = vmatprep.subr.mxu0 0.0
    %552 = vmatpush2.msra.mxu0 0.0
    %553 = vmatprep.mubr.f32.mxu0 0.0
    %554 = vmatmul.mubr.f32.gmra.mxu0 %v487
    %v555 = vpop.f32.mrf.mxu0
    %v556 = vadd.f32 0.0, %v555
    %v557 = vpop.f32.mrf.mxu0
    %558 = vdwg.mxu0
    %v559 = vadd.f32 %v483, %v556
    %v560 = vxor.u32 %v559, 2147483648
    %v561 = vmul.f32 %v560, 1.442695
    %v562 = vpow.pop %v561
    %v563 = vadd.f32 %v562, 1.0
    %v564 = vrcp.pop %v563
    %v565 = vmul.f32 1.0, %v564
    %v566 = vtanh.pop %v559
    %v567 = vmul.f32 %v565, %v475
    %569 = vrot.lane.b32.xlu0 %v566, 32
    %v570 = vpop.permute.xlu0 %569
    %v572 = vmul.f32 %v565, %v570
    %574 = vrot.lane.b32.xlu0 %v572, 32
    %v575 = vpop.permute.xlu0 %574
    %v577 = vadd.f32 %v567, %v575
    %v578 = vtanh.pop %v577
    %580 = vrot.lane.b32.xlu0 %v578, 32
    %v581 = vpop.permute.xlu0 %580
    %v583 = vmul.f32 %v565, %v581
    %s584 = scalar_lea.vmem [#allocation4], 40
    %v585 = vld [vmem:[%s584] sm:$0xff]
    %587 = vrot.lane.b32.xlu0 %v583, 64
    %v588 = vpop.permute.xlu0 %587
    %v589 = vsel %vm73, %v588, 0
    %591 = vmatprep.subr.mxu0 0.0
    %592 = vmatpush1.msra.mxu0 0.0
    %593 = vmatprep.subr.mxu0 0.0
    %594 = vmatpush1.msra.mxu0 0.0
    %595 = vmatprep.subr.mxu0 0.0
    %596 = vmatpush1.msra.mxu0 0.0
    %597 = vmatprep.subr.mxu0 0.0
    %598 = vmatpush1.msra.mxu0 0.0
    %599 = vmatprep.subr.mxu0 0.0
    %600 = vmatpush1.msra.mxu0 0.0
    %601 = vmatprep.subr.mxu0 0.0
    %602 = vmatpush1.msra.mxu0 0.0
    %603 = vmatprep.subr.mxu0 0.0
    %604 = vmatpush1.msra.mxu0 0.0
    %605 = vmatprep.subr.mxu0 0.0
    %606 = vmatpush1.msra.mxu0 0.0
    %607 = vmatprep.subr.mxu0 0.0
    %608 = vmatpush1.msra.mxu0 0.0
    %609 = vmatprep.subr.mxu0 0.0
    %610 = vmatpush1.msra.mxu0 0.0
    %611 = vmatprep.subr.mxu0 0.0
    %612 = vmatpush1.msra.mxu0 0.0
    %613 = vmatprep.subr.mxu0 0.0
    %614 = vmatpush1.msra.mxu0 0.0
    %615 = vmatprep.subr.mxu0 0.0
    %616 = vmatpush1.msra.mxu0 %v69
    %617 = vmatprep.subr.mxu0 0.0
    %618 = vmatpush1.msra.mxu0 %v68
    %619 = vmatprep.subr.mxu0 0.0
    %620 = vmatpush1.msra.mxu0 %v67
    %621 = vmatprep.subr.mxu0 0.0
    %622 = vmatpush1.msra.mxu0 %v66
    %623 = vmatprep.subr.mxu0 0.0
    %624 = vmatpush2.msra.mxu0 0.0
    %625 = vmatprep.subr.mxu0 0.0
    %626 = vmatpush2.msra.mxu0 0.0
    %627 = vmatprep.subr.mxu0 0.0
    %628 = vmatpush2.msra.mxu0 0.0
    %629 = vmatprep.subr.mxu0 0.0
    %630 = vmatpush2.msra.mxu0 0.0
    %631 = vmatprep.subr.mxu0 0.0
    %632 = vmatpush2.msra.mxu0 0.0
    %633 = vmatprep.subr.mxu0 0.0
    %634 = vmatpush2.msra.mxu0 0.0
    %635 = vmatprep.subr.mxu0 0.0
    %636 = vmatpush2.msra.mxu0 0.0
    %637 = vmatprep.subr.mxu0 0.0
    %638 = vmatpush2.msra.mxu0 0.0
    %639 = vmatprep.subr.mxu0 0.0
    %640 = vmatpush2.msra.mxu0 0.0
    %641 = vmatprep.subr.mxu0 0.0
    %642 = vmatpush2.msra.mxu0 0.0
    %643 = vmatprep.subr.mxu0 0.0
    %644 = vmatpush2.msra.mxu0 0.0
    %645 = vmatprep.subr.mxu0 0.0
    %646 = vmatpush2.msra.mxu0 0.0
    %647 = vmatprep.subr.mxu0 0.0
    %648 = vmatpush2.msra.mxu0 0.0
    %649 = vmatprep.subr.mxu0 0.0
    %650 = vmatpush2.msra.mxu0 0.0
    %651 = vmatprep.subr.mxu0 0.0
    %652 = vmatpush2.msra.mxu0 0.0
    %653 = vmatprep.subr.mxu0 0.0
    %654 = vmatpush2.msra.mxu0 0.0
    %655 = vmatprep.mubr.f32.mxu0 0.0
    %656 = vmatmul.mubr.f32.gmra.mxu0 %v589
    %v657 = vpop.f32.mrf.mxu0
    %v658 = vadd.f32 0.0, %v657
    %v659 = vpop.f32.mrf.mxu0
    %660 = vdwg.mxu0
    %v661 = vadd.f32 %v585, %v658
    %v662 = vxor.u32 %v661, 2147483648
    %v663 = vmul.f32 %v662, 1.442695
    %v664 = vpow.pop %v663
    %v665 = vadd.f32 %v664, 1.0
    %v666 = vrcp.pop %v665
    %v667 = vmul.f32 1.0, %v666
    %v668 = vtanh.pop %v661
    %v669 = vmul.f32 %v667, %v577
    %671 = vrot.lane.b32.xlu0 %v668, 32
    %v672 = vpop.permute.xlu0 %671
    %v674 = vmul.f32 %v667, %v672
    %676 = vrot.lane.b32.xlu0 %v674, 32
    %v677 = vpop.permute.xlu0 %676
    %v679 = vadd.f32 %v669, %v677
    %v680 = vtanh.pop %v679
    %682 = vrot.lane.b32.xlu0 %v680, 32
    %v683 = vpop.permute.xlu0 %682
    %v685 = vmul.f32 %v667, %v683
    %s686 = scalar_lea.vmem [#allocation4], 48
    %v687 = vld [vmem:[%s686] sm:$0xff]
    %689 = vrot.lane.b32.xlu0 %v685, 64
    %v690 = vpop.permute.xlu0 %689
    %v691 = vsel %vm73, %v690, 0
    %693 = vmatprep.subr.mxu0 0.0
    %694 = vmatpush1.msra.mxu0 0.0
    %695 = vmatprep.subr.mxu0 0.0
    %696 = vmatpush1.msra.mxu0 0.0
    %697 = vmatprep.subr.mxu0 0.0
    %698 = vmatpush1.msra.mxu0 0.0
    %699 = vmatprep.subr.mxu0 0.0
    %700 = vmatpush1.msra.mxu0 0.0
    %701 = vmatprep.subr.mxu0 0.0
    %702 = vmatpush1.msra.mxu0 0.0
    %703 = vmatprep.subr.mxu0 0.0
    %704 = vmatpush1.msra.mxu0 0.0
    %705 = vmatprep.subr.mxu0 0.0
    %706 = vmatpush1.msra.mxu0 0.0
    %707 = vmatprep.subr.mxu0 0.0
    %708 = vmatpush1.msra.mxu0 0.0
    %709 = vmatprep.subr.mxu0 0.0
    %710 = vmatpush1.msra.mxu0 0.0
    %711 = vmatprep.subr.mxu0 0.0
    %712 = vmatpush1.msra.mxu0 0.0
    %713 = vmatprep.subr.mxu0 0.0
    %714 = vmatpush1.msra.mxu0 0.0
    %715 = vmatprep.subr.mxu0 0.0
    %716 = vmatpush1.msra.mxu0 0.0
    %717 = vmatprep.subr.mxu0 0.0
    %718 = vmatpush1.msra.mxu0 %v69
    %719 = vmatprep.subr.mxu0 0.0
    %720 = vmatpush1.msra.mxu0 %v68
    %721 = vmatprep.subr.mxu0 0.0
    %722 = vmatpush1.msra.mxu0 %v67
    %723 = vmatprep.subr.mxu0 0.0
    %724 = vmatpush1.msra.mxu0 %v66
    %725 = vmatprep.subr.mxu0 0.0
    %726 = vmatpush2.msra.mxu0 0.0
    %727 = vmatprep.subr.mxu0 0.0
    %728 = vmatpush2.msra.mxu0 0.0
    %729 = vmatprep.subr.mxu0 0.0
    %730 = vmatpush2.msra.mxu0 0.0
    %731 = vmatprep.subr.mxu0 0.0
    %732 = vmatpush2.msra.mxu0 0.0
    %733 = vmatprep.subr.mxu0 0.0
    %734 = vmatpush2.msra.mxu0 0.0
    %735 = vmatprep.subr.mxu0 0.0
    %736 = vmatpush2.msra.mxu0 0.0
    %737 = vmatprep.subr.mxu0 0.0
    %738 = vmatpush2.msra.mxu0 0.0
    %739 = vmatprep.subr.mxu0 0.0
    %740 = vmatpush2.msra.mxu0 0.0
    %741 = vmatprep.subr.mxu0 0.0
    %742 = vmatpush2.msra.mxu0 0.0
    %743 = vmatprep.subr.mxu0 0.0
    %744 = vmatpush2.msra.mxu0 0.0
    %745 = vmatprep.subr.mxu0 0.0
    %746 = vmatpush2.msra.mxu0 0.0
    %747 = vmatprep.subr.mxu0 0.0
    %748 = vmatpush2.msra.mxu0 0.0
    %749 = vmatprep.subr.mxu0 0.0
    %750 = vmatpush2.msra.mxu0 0.0
    %751 = vmatprep.subr.mxu0 0.0
    %752 = vmatpush2.msra.mxu0 0.0
    %753 = vmatprep.subr.mxu0 0.0
    %754 = vmatpush2.msra.mxu0 0.0
    %755 = vmatprep.subr.mxu0 0.0
    %756 = vmatpush2.msra.mxu0 0.0
    %757 = vmatprep.mubr.f32.mxu0 0.0
    %758 = vmatmul.mubr.f32.gmra.mxu0 %v691
    %v759 = vpop.f32.mrf.mxu0
    %v760 = vadd.f32 0.0, %v759
    %v761 = vpop.f32.mrf.mxu0
    %762 = vdwg.mxu0
    %v763 = vadd.f32 %v687, %v760
    %v764 = vxor.u32 %v763, 2147483648
    %v765 = vmul.f32 %v764, 1.442695
    %v766 = vpow.pop %v765
    %v767 = vadd.f32 %v766, 1.0
    %v768 = vrcp.pop %v767
    %v769 = vmul.f32 1.0, %v768
    %v770 = vtanh.pop %v763
    %v771 = vmul.f32 %v769, %v679
    %773 = vrot.lane.b32.xlu0 %v770, 32
    %v774 = vpop.permute.xlu0 %773
    %v776 = vmul.f32 %v769, %v774
    %778 = vrot.lane.b32.xlu0 %v776, 32
    %v779 = vpop.permute.xlu0 %778
    %v781 = vadd.f32 %v771, %v779
    %v782 = vtanh.pop %v781
    %784 = vrot.lane.b32.xlu0 %v782, 32
    %v785 = vpop.permute.xlu0 %784
    %v787 = vmul.f32 %v769, %v785
    %s788 = scalar_lea.vmem [#allocation4], 56
    %v789 = vld [vmem:[%s788] sm:$0xff]
    %791 = vrot.lane.b32.xlu0 %v787, 64
    %v792 = vpop.permute.xlu0 %791
    %v793 = vsel %vm73, %v792, 0
    %795 = vmatprep.subr.mxu0 0.0
    %796 = vmatpush1.msra.mxu0 0.0
    %797 = vmatprep.subr.mxu0 0.0
    %798 = vmatpush1.msra.mxu0 0.0
    %799 = vmatprep.subr.mxu0 0.0
    %800 = vmatpush1.msra.mxu0 0.0
    %801 = vmatprep.subr.mxu0 0.0
    %802 = vmatpush1.msra.mxu0 0.0
    %803 = vmatprep.subr.mxu0 0.0
    %804 = vmatpush1.msra.mxu0 0.0
    %805 = vmatprep.subr.mxu0 0.0
    %806 = vmatpush1.msra.mxu0 0.0
    %807 = vmatprep.subr.mxu0 0.0
    %808 = vmatpush1.msra.mxu0 0.0
    %809 = vmatprep.subr.mxu0 0.0
    %810 = vmatpush1.msra.mxu0 0.0
    %811 = vmatprep.subr.mxu0 0.0
    %812 = vmatpush1.msra.mxu0 0.0
    %813 = vmatprep.subr.mxu0 0.0
    %814 = vmatpush1.msra.mxu0 0.0
    %815 = vmatprep.subr.mxu0 0.0
    %816 = vmatpush1.msra.mxu0 0.0
    %817 = vmatprep.subr.mxu0 0.0
    %818 = vmatpush1.msra.mxu0 0.0
    %819 = vmatprep.subr.mxu0 0.0
    %820 = vmatpush1.msra.mxu0 %v69
    %821 = vmatprep.subr.mxu0 0.0
    %822 = vmatpush1.msra.mxu0 %v68
    %823 = vmatprep.subr.mxu0 0.0
    %824 = vmatpush1.msra.mxu0 %v67
    %825 = vmatprep.subr.mxu0 0.0
    %826 = vmatpush1.msra.mxu0 %v66
    %827 = vmatprep.subr.mxu0 0.0
    %828 = vmatpush2.msra.mxu0 0.0
    %829 = vmatprep.subr.mxu0 0.0
    %830 = vmatpush2.msra.mxu0 0.0
    %831 = vmatprep.subr.mxu0 0.0
    %832 = vmatpush2.msra.mxu0 0.0
    %833 = vmatprep.subr.mxu0 0.0
    %834 = vmatpush2.msra.mxu0 0.0
    %835 = vmatprep.subr.mxu0 0.0
    %836 = vmatpush2.msra.mxu0 0.0
    %837 = vmatprep.subr.mxu0 0.0
    %838 = vmatpush2.msra.mxu0 0.0
    %839 = vmatprep.subr.mxu0 0.0
    %840 = vmatpush2.msra.mxu0 0.0
    %841 = vmatprep.subr.mxu0 0.0
    %842 = vmatpush2.msra.mxu0 0.0
    %843 = vmatprep.subr.mxu0 0.0
    %844 = vmatpush2.msra.mxu0 0.0
    %845 = vmatprep.subr.mxu0 0.0
    %846 = vmatpush2.msra.mxu0 0.0
    %847 = vmatprep.subr.mxu0 0.0
    %848 = vmatpush2.msra.mxu0 0.0
    %849 = vmatprep.subr.mxu0 0.0
    %850 = vmatpush2.msra.mxu0 0.0
    %851 = vmatprep.subr.mxu0 0.0
    %852 = vmatpush2.msra.mxu0 0.0
    %853 = vmatprep.subr.mxu0 0.0
    %854 = vmatpush2.msra.mxu0 0.0
    %855 = vmatprep.subr.mxu0 0.0
    %856 = vmatpush2.msra.mxu0 0.0
    %857 = vmatprep.subr.mxu0 0.0
    %858 = vmatpush2.msra.mxu0 0.0
    %859 = vmatprep.mubr.f32.mxu0 0.0
    %860 = vmatmul.mubr.f32.gmra.mxu0 %v793
    %v861 = vpop.f32.mrf.mxu0
    %v862 = vadd.f32 0.0, %v861
    %v863 = vpop.f32.mrf.mxu0
    %864 = vdwg.mxu0
    %v865 = vadd.f32 %v789, %v862
    %v866 = vxor.u32 %v865, 2147483648
    %v867 = vmul.f32 %v866, 1.442695
    %v868 = vpow.pop %v867
    %v869 = vadd.f32 %v868, 1.0
    %v870 = vrcp.pop %v869
    %v871 = vmul.f32 1.0, %v870
    %v872 = vtanh.pop %v865
    %v873 = vmul.f32 %v871, %v781
    %875 = vrot.lane.b32.xlu0 %v872, 32
    %v876 = vpop.permute.xlu0 %875
    %v878 = vmul.f32 %v871, %v876
    %880 = vrot.lane.b32.xlu0 %v878, 32
    %v881 = vpop.permute.xlu0 %880
    %v883 = vadd.f32 %v873, %v881
    %v884 = vtanh.pop %v883
    %886 = vrot.lane.b32.xlu0 %v884, 32
    %v887 = vpop.permute.xlu0 %886
    %v889 = vmul.f32 %v871, %v887
    %891 = vrot.lane.b32.xlu0 %v889, 64
    %v892 = vpop.permute.xlu0 %891
    %894 = vst.msk [vmem:[#allocation2] sm:$0xff] %vm73, %v892
    %896 = vrot.lane.b32.xlu0 %v883, 96
    %v897 = vpop.permute.xlu0 %896
    %899 = vst.msk [vmem:[#allocation3] sm:$0xff] %vm73, %v897
    // Predicated region
    $region34: #{tpu_custom_call.1} parent=1 // pred_check
      %p900 = pneg %p59
    $region35: #{tpu_custom_call.1} parent=1 // pred_check_branch
      %902 = sbr.rel (%p900) target = $region37
    $region36: #{tpu_custom_call.1} parent=1 // pred_region
      %v903 = vld [vmem:[#allocation9] sm:$0xff]
      %v904 = vld [vmem:[#allocation9 + $0x8] sm:$0xff]
      %v905 = vld [vmem:[#allocation9 + $0x10] sm:$0xff]
      %v906 = vld [vmem:[#allocation9 + $0x18] sm:$0xff]
      %v907 = vld [vmem:[%s3] sm:$0x1]
      %v909 = vlaneseq
      %v910 = vshrl.u32 %v909, 7
      %v911 = vsub.s32 0, %v910
      %v912 = vrot.slane %v907, %v911
      %v914 = vsel %vm73, %v892, 0
      %916 = vmatprep.subr.mxu0 0.0
      %917 = vmatpush1.msra.mxu0 0.0
      %918 = vmatprep.subr.mxu0 0.0
      %919 = vmatpush1.msra.mxu0 0.0
      %920 = vmatprep.subr.mxu0 0.0
      %921 = vmatpush1.msra.mxu0 0.0
      %922 = vmatprep.subr.mxu0 0.0
      %923 = vmatpush1.msra.mxu0 0.0
      %924 = vmatprep.subr.mxu0 0.0
      %925 = vmatpush1.msra.mxu0 0.0
      %926 = vmatprep.subr.mxu0 0.0
      %927 = vmatpush1.msra.mxu0 0.0
      %928 = vmatprep.subr.mxu0 0.0
      %929 = vmatpush1.msra.mxu0 0.0
      %930 = vmatprep.subr.mxu0 0.0
      %931 = vmatpush1.msra.mxu0 0.0
      %932 = vmatprep.subr.mxu0 0.0
      %933 = vmatpush1.msra.mxu0 0.0
      %934 = vmatprep.subr.mxu0 0.0
      %935 = vmatpush1.msra.mxu0 0.0
      %936 = vmatprep.subr.mxu0 0.0
      %937 = vmatpush1.msra.mxu0 0.0
      %938 = vmatprep.subr.mxu0 0.0
      %939 = vmatpush1.msra.mxu0 0.0
      %940 = vmatprep.subr.mxu0 0.0
      %941 = vmatpush1.msra.mxu0 %v906
      %942 = vmatprep.subr.mxu0 0.0
      %943 = vmatpush1.msra.mxu0 %v905
      %944 = vmatprep.subr.mxu0 0.0
      %945 = vmatpush1.msra.mxu0 %v904
      %946 = vmatprep.subr.mxu0 0.0
      %947 = vmatpush1.msra.mxu0 %v903
      %948 = vmatprep.subr.mxu0 0.0
      %949 = vmatpush2.msra.mxu0 0.0
      %950 = vmatprep.subr.mxu0 0.0
      %951 = vmatpush2.msra.mxu0 0.0
      %952 = vmatprep.subr.mxu0 0.0
      %953 = vmatpush2.msra.mxu0 0.0
      %954 = vmatprep.subr.mxu0 0.0
      %955 = vmatpush2.msra.mxu0 0.0
      %956 = vmatprep.subr.mxu0 0.0
      %957 = vmatpush2.msra.mxu0 0.0
      %958 = vmatprep.subr.mxu0 0.0
      %959 = vmatpush2.msra.mxu0 0.0
      %960 = vmatprep.subr.mxu0 0.0
      %961 = vmatpush2.msra.mxu0 0.0
      %962 = vmatprep.subr.mxu0 0.0
      %963 = vmatpush2.msra.mxu0 0.0
      %964 = vmatprep.subr.mxu0 0.0
      %965 = vmatpush2.msra.mxu0 0.0
      %966 = vmatprep.subr.mxu0 0.0
      %967 = vmatpush2.msra.mxu0 0.0
      %968 = vmatprep.subr.mxu0 0.0
      %969 = vmatpush2.msra.mxu0 0.0
      %970 = vmatprep.subr.mxu0 0.0
      %971 = vmatpush2.msra.mxu0 0.0
      %972 = vmatprep.subr.mxu0 0.0
      %973 = vmatpush2.msra.mxu0 0.0
      %974 = vmatprep.subr.mxu0 0.0
      %975 = vmatpush2.msra.mxu0 0.0
      %976 = vmatprep.subr.mxu0 0.0
      %977 = vmatpush2.msra.mxu0 0.0
      %978 = vmatprep.subr.mxu0 0.0
      %979 = vmatpush2.msra.mxu0 0.0
      %980 = vmatprep.mubr.f32.mxu0 0.0
      %981 = vmatmul.mubr.f32.gmra.mxu0 %v914
      %v982 = vpop.f32.mrf.mxu0
      %v983 = vadd.f32 %v912, %v982
      %v984 = vpop.f32.mrf.mxu0
      %985 = vdwg.mxu0
      %986 = vst [vmem:[#allocation10] sm:$0xff] %v983
    $region37: #{tpu_custom_call.1} parent=1 // pred_fallthru
      _
    // Predicated region
    $region38: #{tpu_custom_call.1} parent=1 // pred_check
      _
    $region39: #{tpu_custom_call.1} parent=1 // pred_check_branch
      %988 = sbr.rel (0) target = $region41
    $region40: #{tpu_custom_call.1} parent=1 // pred_region
      %s990 = ssub.s32 128, 128
      %991 = vsyncadd [#allocation6], %s990
      %s993 = sshll.u32 [#allocation10], 4
      %s994 = int_to_ptr.vmem [resolvable:$true] %s993
      %996 = dma.vmem_to_hbm [thread:$0]  %s994, 128, %s4, [#allocation6]
    $region41: #{tpu_custom_call.1} parent=1 // pred_fallthru
      _
    // Predicated region
    $region42: #{tpu_custom_call.1} parent=1 // pred_check
      _
    $region43: #{tpu_custom_call.1} parent=1 // pred_check_branch
      %998 = sbr.rel (0) target = $region45
    $region44: #{tpu_custom_call.1} parent=1 // pred_region
      %999 = dma.done [#allocation6], 128
    $region45: #{tpu_custom_call.1} parent=1 // pred_fallthru
      _
    %1000 = vsyncpa [#allocation5], 1
    %1001 = vsyncpa [#allocation8], 1
    %1002 = vsyncpa [#allocation6], 1

</llo_original>
